<compile_context>
chip_gen: v5e
topology: v5e:2x2
jax: 0.10.0
libtpu: 0.0.40
codegen_flags: <defaults>
</compile_context>

<pallas_src>
import math

import jax
import jax.numpy as jnp
from jax.experimental import pallas as pl
from jax.experimental.pallas import tpu as pltpu

B, D, H = 1024, 32, 32          # batch, feature dim, hidden dim


def actionnet_kernel(x_ref, t_ref, w1x_ref, w1t_ref, b1_ref, w2_ref, b2_ref, out_ref):
    """Fused forward for one batch tile.

    x_ref   : [Bt, D]  f32      activations in natural (batch-major) HBM layout
    t_ref   : [1, Bt]  f32      time feature per sample (lane-dense row)
    w1x_ref : [H, D]   bf16     layer-1 weight, x part      (resident)
    w1t_ref : [H, 1]   f32      layer-1 weight, t part      (resident)
    b1_ref  : [H, 1]   f32      layer-1 bias                (resident)
    w2_ref  : [D, H]   bf16     layer-2 weight              (resident)
    b2_ref  : [D, 1]   f32      layer-2 bias                (resident)
    out_ref : [1, Bt]  f32      0.5 * ||x - h||^2 per sample (lane-dense)
    """
    # In-kernel transpose to feature-major: batch maps to the 128-lane axis.
    # A [Bt, 32] f32 -> [32, Bt] transpose is a few XLU vxpose ops (vector
    # extended slot) and is hidden under the input DMA; doing it here removes
    # the wrapper-side HBM->HBM x.T copy entirely.
    x = x_ref[...].T                                 # [D, Bt] f32
    t = t_ref[...]                                   # [1, Bt] f32

    # layer 1: MXU matmul in bf16, f32 accumulation; t enters as a rank-1 VPU term.
    z1 = jnp.dot(w1x_ref[...], x.astype(jnp.bfloat16),
                 preferred_element_type=jnp.float32)          # [H, Bt]
    z1 = z1 + w1t_ref[...] * t + b1_ref[...]                   # broadcast [H,1]*[1,Bt]
    h1 = jnp.tanh(z1)                                          # f32 (EUP)

    # layer 2: MXU matmul in bf16, f32 accumulation.
    h = jnp.dot(w2_ref[...], h1.astype(jnp.bfloat16),
                preferred_element_type=jnp.float32) + b2_ref[...]   # [D, Bt]

    # ActionNet head: 0.5 * ||x - h||^2 per sample; sublane reduction keeps the
    # result lane-dense ([1, Bt]) so the store is an unmasked vst.
    diff = x - h                                               # [D, Bt] f32
    out_ref[...] = 0.5 * jnp.sum(diff * diff, axis=0, keepdims=True)


def prepare_kernel_params(params):
    """Standard-layout f32 params -> kernel-layout params (split W1, bf16 MXU weights)."""
    w1, b1, w2, b2 = params          # w1: [D+1, H], b1: [H], w2: [H, D], b2: [D]
    d = w1.shape[0] - 1
    h = w1.shape[1]
    w1x_t = jnp.asarray(w1[:d].T, dtype=jnp.bfloat16)          # [H, D] bf16
    w1t_c = jnp.asarray(w1[d:d + 1].T, dtype=jnp.float32)      # [H, 1] f32
    b1_c = b1.reshape(h, 1).astype(jnp.float32)                # [H, 1]
    w2_t = jnp.asarray(w2.T, dtype=jnp.bfloat16)               # [D, H] bf16
    b2_c = b2.reshape(d, 1).astype(jnp.float32)                # [D, 1]
    return w1x_t, w1t_c, b1_c, w2_t, b2_c


def action_net_forward(t, x, kernel_params):
    """t: [B, 1], x: [B, D] -> [B, 1]."""
    w1x_t, w1t_c, b1_c, w2_t, b2_c = kernel_params
    b, d = x.shape
    h = w1x_t.shape[0]

    # Exactly 2 parallel tiles when the batch splits into lane-dense halves
    # (128-lane multiples): on v7x each TensorCore gets one tile / one grid
    # step; on v5e/v6e it is only 2 steps of ~0.35 us fixed cost.  Otherwise
    # fall back to a single full-batch tile (full-dim blocks are always legal).
    num_tiles = 2 if (b % 256 == 0) else 1
    b_tile = b // num_tiles

    # t is [B, 1] contiguous -> [1, B] row (tiny, ~4 KiB); x is passed in its
    # natural [B, D] layout — no wrapper-side transpose of the big operand.
    t_row = t.reshape(1, b)

    out_row = pl.pallas_call(
        actionnet_kernel,
        out_shape=jax.ShapeDtypeStruct((1, b), jnp.float32),
        grid=(num_tiles,),
        in_specs=[
            pl.BlockSpec((b_tile, d), lambda i: (i, 0)),       # x tile, natural layout (pipelined)
            pl.BlockSpec((1, b_tile), lambda i: (0, i)),       # t tile (pipelined)
            pl.BlockSpec((h, d), lambda i: (0, 0)),            # W1x   (resident)
            pl.BlockSpec((h, 1), lambda i: (0, 0)),            # w1t   (resident)
            pl.BlockSpec((h, 1), lambda i: (0, 0)),            # b1    (resident)
            pl.BlockSpec((d, h), lambda i: (0, 0)),            # W2    (resident)
            pl.BlockSpec((d, 1), lambda i: (0, 0)),            # b2    (resident)
        ],
        out_specs=pl.BlockSpec((1, b_tile), lambda i: (0, i)),  # lane-dense output row
        compiler_params=pltpu.CompilerParams(
            dimension_semantics=("parallel",),                  # shard the 2 tiles across TCs (v7x)
        ),
    )(x, t_row, w1x_t, w1t_c, b1_c, w2_t, b2_c)

    return out_row.reshape(b, 1)


def init_params(key):
    """Deterministic PyTorch-Linear-style uniform init (U[-1/sqrt(fan_in), +])."""
    k1, k2, k3, k4 = jax.random.split(key, 4)
    lim1 = 1.0 / math.sqrt(D + 1)
    w1 = jax.random.uniform(k1, (D + 1, H), jnp.float32, -lim1, lim1)
    b1 = jax.random.uniform(k2, (H,), jnp.float32, -lim1, lim1)
    lim2 = 1.0 / math.sqrt(H)
    w2 = jax.random.uniform(k3, (H, D), jnp.float32, -lim2, lim2)
    b2 = jax.random.uniform(k4, (D,), jnp.float32, -lim2, lim2)
    return w1, b1, w2, b2


def reference_forward_f32(t, x, params):
    """Pure-JAX f32 reference mirroring the PyTorch semantics exactly."""
    w1, b1, w2, b2 = params
    xt = jnp.concatenate([x, t], axis=1)
    h1 = jnp.tanh(xt @ w1 + b1)
    h = h1 @ w2 + b2
    return 0.5 * jnp.sum((x - h) ** 2, axis=1, keepdims=True)


def reference_forward_mixed(t, x, params):
    """Pure-JAX reference with the same bf16-MXU / f32-elsewhere precision as the kernel."""
    w1, b1, w2, b2 = params
    d = x.shape[1]
    z1 = jnp.dot(x.astype(jnp.bfloat16), w1[:d].astype(jnp.bfloat16),
                 preferred_element_type=jnp.float32)
    z1 = z1 + t * w1[d:d + 1] + b1
    h1 = jnp.tanh(z1)
    h = jnp.dot(h1.astype(jnp.bfloat16), w2.astype(jnp.bfloat16),
                preferred_element_type=jnp.float32) + b2
    return 0.5 * jnp.sum((x - h) ** 2, axis=1, keepdims=True)


if __name__ == "__main__":
    key = jax.random.PRNGKey(0)
    kp, kx, kt = jax.random.split(key, 3)

    params = init_params(kp)
    kernel_params = prepare_kernel_params(params)

    x = jax.random.normal(kx, (B, D), jnp.float32)
    t = jax.random.uniform(kt, (B, 1), jnp.float32)

    out = action_net_forward(t, x, kernel_params)
    out = jax.block_until_ready(out)
    assert out.shape == (B, 1)

    # Tight check against a reference with the same (bf16-matmul, f32 elsewhere) precision.
    ref_mixed = reference_forward_mixed(t, x, params)
    assert jnp.allclose(out, ref_mixed, atol=2e-3, rtol=2e-3), "mismatch vs mixed-precision reference"

    # Looser sanity check against the full-f32 PyTorch-equivalent reference.
    ref_f32 = reference_forward_f32(t, x, params)
    assert jnp.allclose(out, ref_f32, atol=5e-2, rtol=5e-2), "mismatch vs f32 reference"

    print("KERNEL_OK")
</pallas_src>

<mosaic_0001>
module attributes {stable_mosaic.version = 11 : i64} {
  func.func @actionnet_kernel(%arg0: i32, %arg1: memref<512x32xf32, #tpu.memory_space<vmem>>, %arg2: memref<1x512xf32, #tpu.memory_space<vmem>>, %arg3: memref<32x32xbf16, #tpu.memory_space<vmem>>, %arg4: memref<32x1xf32, #tpu.memory_space<vmem>>, %arg5: memref<32x1xf32, #tpu.memory_space<vmem>>, %arg6: memref<32x32xbf16, #tpu.memory_space<vmem>>, %arg7: memref<32x1xf32, #tpu.memory_space<vmem>>, %arg8: memref<1x512xf32, #tpu.memory_space<vmem>>) attributes {dimension_semantics = [#tpu.dimension_semantics<parallel>], iteration_bounds = array<i64: 2>, scalar_prefetch = 0 : i64, scratch_operands = 0 : i64, tpu.core_type = #tpu.core_type<tc>, window_params = [{transform_indices = @transform_0, window_bounds = array<i64: 512, 32>}, {transform_indices = @transform_1, window_bounds = array<i64: 1, 512>}, {pipeline_mode = #tpu.pipeline_mode<synchronous>, transform_indices = @transform_2, window_bounds = array<i64: 32, 32>}, {pipeline_mode = #tpu.pipeline_mode<synchronous>, transform_indices = @transform_3, window_bounds = array<i64: 32, 1>}, {pipeline_mode = #tpu.pipeline_mode<synchronous>, transform_indices = @transform_4, window_bounds = array<i64: 32, 1>}, {pipeline_mode = #tpu.pipeline_mode<synchronous>, transform_indices = @transform_5, window_bounds = array<i64: 32, 32>}, {pipeline_mode = #tpu.pipeline_mode<synchronous>, transform_indices = @transform_6, window_bounds = array<i64: 32, 1>}, {transform_indices = @transform_7, window_bounds = array<i64: 1, 512>}]} {
    %c0 = arith.constant 0 : index
    %c0_0 = arith.constant 0 : index
    %0 = vector.load %arg1[%c0, %c0_0] : memref<512x32xf32, #tpu.memory_space<vmem>>, vector<512x32xf32>
    %1 = tpu.transpose %0, [1, 0] : vector<512x32xf32> -> vector<32x512xf32>
    %c0_1 = arith.constant 0 : index
    %c0_2 = arith.constant 0 : index
    %2 = vector.load %arg2[%c0_1, %c0_2] : memref<1x512xf32, #tpu.memory_space<vmem>>, vector<1x512xf32>
    %c0_3 = arith.constant 0 : index
    %c0_4 = arith.constant 0 : index
    %3 = vector.load %arg3[%c0_3, %c0_4] : memref<32x32xbf16, #tpu.memory_space<vmem>>, vector<32x32xbf16>
    %4 = arith.truncf %1 : vector<32x512xf32> to vector<32x512xbf16>
    %cst = arith.constant dense<0.000000e+00> : vector<32x512xf32>
    %5 = tpu.matmul %3, %4, %cst {dimension_numbers = #tpu.dot_dimension_numbers<[1], [0], [0], [1], [0, 0, 1, 1], [], []>} : vector<32x32xbf16>, vector<32x512xbf16>, vector<32x512xf32> -> vector<32x512xf32>
    %c0_5 = arith.constant 0 : index
    %c0_6 = arith.constant 0 : index
    %6 = vector.load %arg4[%c0_5, %c0_6] : memref<32x1xf32, #tpu.memory_space<vmem>>, vector<32x1xf32>
    %7 = vector.broadcast %6 : vector<32x1xf32> to vector<32x512xf32>
    %8 = vector.broadcast %2 : vector<1x512xf32> to vector<32x512xf32>
    %9 = arith.mulf %7, %8 : vector<32x512xf32>
    %10 = arith.addf %5, %9 : vector<32x512xf32>
    %c0_7 = arith.constant 0 : index
    %c0_8 = arith.constant 0 : index
    %11 = vector.load %arg5[%c0_7, %c0_8] : memref<32x1xf32, #tpu.memory_space<vmem>>, vector<32x1xf32>
    %12 = vector.broadcast %11 : vector<32x1xf32> to vector<32x512xf32>
    %13 = arith.addf %10, %12 : vector<32x512xf32>
    %14 = math.tanh %13 : vector<32x512xf32>
    %c0_9 = arith.constant 0 : index
    %c0_10 = arith.constant 0 : index
    %15 = vector.load %arg6[%c0_9, %c0_10] : memref<32x32xbf16, #tpu.memory_space<vmem>>, vector<32x32xbf16>
    %16 = arith.truncf %14 : vector<32x512xf32> to vector<32x512xbf16>
    %cst_11 = arith.constant dense<0.000000e+00> : vector<32x512xf32>
    %17 = tpu.matmul %15, %16, %cst_11 {dimension_numbers = #tpu.dot_dimension_numbers<[1], [0], [0], [1], [0, 0, 1, 1], [], []>} : vector<32x32xbf16>, vector<32x512xbf16>, vector<32x512xf32> -> vector<32x512xf32>
    %c0_12 = arith.constant 0 : index
    %c0_13 = arith.constant 0 : index
    %18 = vector.load %arg7[%c0_12, %c0_13] : memref<32x1xf32, #tpu.memory_space<vmem>>, vector<32x1xf32>
    %19 = vector.broadcast %18 : vector<32x1xf32> to vector<32x512xf32>
    %20 = arith.addf %17, %19 : vector<32x512xf32>
    %21 = arith.subf %1, %20 : vector<32x512xf32>
    %22 = arith.mulf %21, %21 : vector<32x512xf32>
    %cst_14 = arith.constant dense<0.000000e+00> : vector<512xf32>
    %23 = vector.multi_reduction <add>, %22, %cst_14 [0] : vector<32x512xf32> to vector<512xf32>
    %24 = vector.shape_cast %23 : vector<512xf32> to vector<1x512xf32>
    %cst_15 = arith.constant 5.000000e-01 : f32
    %25 = vector.broadcast %cst_15 : f32 to vector<1x512xf32>
    %26 = arith.mulf %25, %24 : vector<1x512xf32>
    %c0_16 = arith.constant 0 : index
    %c0_17 = arith.constant 0 : index
    %27 = vector.load %arg8[%c0_16, %c0_17] : memref<1x512xf32, #tpu.memory_space<vmem>>, vector<1x512xf32>
    tpu.vector_store %arg8[%c0_16, %c0_17], %26 {strides = array<i32>} : memref<1x512xf32, #tpu.memory_space<vmem>>, vector<1x512xf32>,
    return
  }
  func.func @transform_0(%arg0: i32) -> (i32, i32) {
    %c0_i32 = arith.constant 0 : i32
    %c0_i32_0 = arith.constant 0 : i32
    return %arg0, %c0_i32 : i32, i32
  }
  func.func @transform_1(%arg0: i32) -> (i32, i32) {
    %c0_i32 = arith.constant 0 : i32
    %c0_i32_0 = arith.constant 0 : i32
    return %c0_i32, %arg0 : i32, i32
  }
  func.func @transform_2(%arg0: i32) -> (i32, i32) {
    %c0_i32 = arith.constant 0 : i32
    %c0_i32_0 = arith.constant 0 : i32
    %c0_i32_1 = arith.constant 0 : i32
    return %c0_i32, %c0_i32_0 : i32, i32
  }
  func.func @transform_3(%arg0: i32) -> (i32, i32) {
    %c0_i32 = arith.constant 0 : i32
    %c0_i32_0 = arith.constant 0 : i32
    %c0_i32_1 = arith.constant 0 : i32
    return %c0_i32, %c0_i32_0 : i32, i32
  }
  func.func @transform_4(%arg0: i32) -> (i32, i32) {
    %c0_i32 = arith.constant 0 : i32
    %c0_i32_0 = arith.constant 0 : i32
    %c0_i32_1 = arith.constant 0 : i32
    return %c0_i32, %c0_i32_0 : i32, i32
  }
  func.func @transform_5(%arg0: i32) -> (i32, i32) {
    %c0_i32 = arith.constant 0 : i32
    %c0_i32_0 = arith.constant 0 : i32
    %c0_i32_1 = arith.constant 0 : i32
    return %c0_i32, %c0_i32_0 : i32, i32
  }
  func.func @transform_6(%arg0: i32) -> (i32, i32) {
    %c0_i32 = arith.constant 0 : i32
    %c0_i32_0 = arith.constant 0 : i32
    %c0_i32_1 = arith.constant 0 : i32
    return %c0_i32, %c0_i32_0 : i32, i32
  }
  func.func @transform_7(%arg0: i32) -> (i32, i32) {
    %c0_i32 = arith.constant 0 : i32
    %c0_i32_0 = arith.constant 0 : i32
    return %c0_i32, %arg0 : i32, i32
  }
}

</mosaic_0001>

<llo_original>
// kernel: tpu_custom_call.1
$region0: #{tpu_custom_call.1}
  #allocation0 [shape = 'u32[]', space=smem, size = 0x4, offset = 0x4, fixed_abs, tag = 'smem constant byte address 0x4 - core index']
  #allocation1 [shape = 'u32[72,128]{1,0:T(1,128)}', space=vmem, size = 0x9000, scoped, tag = 'internal scratch']
  %s0 = inlined_call_operand.vmem [shape: f32[1024,32], index: 0, kind: input, shape index: {}]
  %s1 = inlined_call_operand.vmem [shape: f32[1,1024], index: 1, kind: input, shape index: {}]
  %s2 = inlined_call_operand.vmem [shape: bf16[32,32], index: 2, kind: input, shape index: {}]
  %s3 = inlined_call_operand.vmem [shape: f32[32,1], index: 3, kind: input, shape index: {}]
  %s4 = inlined_call_operand.vmem [shape: f32[32,1], index: 4, kind: input, shape index: {}]
  %s5 = inlined_call_operand.vmem [shape: bf16[32,32], index: 5, kind: input, shape index: {}]
  %s6 = inlined_call_operand.vmem [shape: f32[32,1], index: 6, kind: input, shape index: {}]
  %s7 = inlined_call_operand.hbm [shape: f32[1,1024], index: 7, kind: output, shape index: {}]
  %s8 = sld [smem:[#allocation0]]
  $region61: #{tpu_custom_call.1} parent=0
    _
  %s10 = ssub.s32 1, %s8
  %s11 = scalar_select 0, %s10, %s8
  $region1: #{tpu_custom_call.1} parent=0
    #allocation2 [shape = 'u8[4096]{0}', space=vmem, size = 0x1000, scoped, tag = 'output window, operand 0']
    #allocation3 [shape = 's32[2]{0}', space=sflag, size = 0x8, scoped, tag = 'scoped memory for tpu_custom_call.1']
    %12 = vsyncpa [#allocation3], 0
    %s13 = scalar_lea.sflag [#allocation3], 1
    %14 = vsyncpa %s13, 0
    loop: start=0, step=1, limit=4
    $region2: #{tpu_custom_call.1} parent=1 // loop_pre_header
      _
    $region3: #{tpu_custom_call.1} parent=1 // loop_header
      %s16 = sphi 0, %s20
      %p17 = scmp.ge.s32.totalorder %s16, 4
      %s26 = sphi 0, %s28
      %s29 = sphi 0, %s26
      %s30 = sphi 0, %s29
      %s46 = sphi 0, %s30
      %s52 = sphi 0, %s54
      %s55 = sphi 0, %s52
      %s56 = sphi 0, %s55
      %s72 = sphi 0, %s56
      %s76 = sphi 0, %s76
      %s78 = sphi 0, %s76
      %s79 = sphi 0, %s78
      %s93 = sphi 0, %s79
      %s97 = sphi 0, %s97
      %s99 = sphi 0, %s97
      %s100 = sphi 0, %s99
      %s114 = sphi 0, %s100
      %s118 = sphi 0, %s118
      %s120 = sphi 0, %s118
      %s121 = sphi 0, %s120
      %s135 = sphi 0, %s121
      %s139 = sphi 0, %s139
      %s141 = sphi 0, %s139
      %s142 = sphi 0, %s141
      %s156 = sphi 0, %s142
      %s160 = sphi 0, %s160
      %s162 = sphi 0, %s160
      %s163 = sphi 0, %s162
      %s177 = sphi 0, %s163
      %s183 = sphi 0, %s185
      %s186 = sphi 0, %s183
      %s187 = sphi 0, %s186
      %s203 = sphi 0, %s187
    $region4: #{tpu_custom_call.1} parent=1 // loop_header_branch
      %19 = sbr.rel (%p17) target = $region8
    $region5: #{tpu_custom_call.1} parent=1 // loop_body
      %s21 = ssub.s32 %s16, 1
      %s22 = ssub.s32 %s16, 2
      %s23 = sadd.s32 %s16, 1
      %s24 = ssub.s32 %s16, %s23
      %p25 = scmp.eq.s32.totalorder %s24, 0
      %s27 = sadd.s32 %s26, 1
      %s28 = scalar_select %p25, %s26, %s27
      %p31 = pneg %p25
      %p32 = scmp.eq.s32.totalorder %s16, 1
      %p33 = por %p31, %p32
      %p34 = scmp.ne.s32.totalorder %s26, %s29
      %p35 = scmp.eq.s32.totalorder %s16, 0
      %p36 = por %p34, %p35
      %p37 = scmp.ne.s32.totalorder %s26, %s29
      %p38 = scmp.eq.s32.totalorder %s21, 1
      %p39 = por %p37, %p38
      %p40 = scmp.ne.s32.totalorder %s29, %s30
      %p41 = scmp.eq.s32.totalorder %s21, 0
      %p42 = por %p40, %p41
      %p43 = scmp.ne.s32.totalorder %s29, %s30
      %p44 = scmp.eq.s32.totalorder %s22, 1
      %p45 = por %p43, %p44
      %p47 = scmp.ne.s32.totalorder %s30, %s46
      %p48 = scmp.eq.s32.totalorder %s22, 0
      %p49 = por %p47, %p48
      %s50 = ssub.s32 %s16, %s23
      %p51 = scmp.eq.s32.totalorder %s50, 0
      %s53 = sadd.s32 %s52, 1
      %s54 = scalar_select %p51, %s52, %s53
      %p57 = pneg %p51
      %p58 = scmp.eq.s32.totalorder %s16, 1
      %p59 = por %p57, %p58
      %p60 = scmp.ne.s32.totalorder %s52, %s55
      %p61 = scmp.eq.s32.totalorder %s16, 0
      %p62 = por %p60, %p61
      %p63 = scmp.ne.s32.totalorder %s52, %s55
      %p64 = scmp.eq.s32.totalorder %s21, 1
      %p65 = por %p63, %p64
      %p66 = scmp.ne.s32.totalorder %s55, %s56
      %p67 = scmp.eq.s32.totalorder %s21, 0
      %p68 = por %p66, %p67
      %p69 = scmp.ne.s32.totalorder %s55, %s56
      %p70 = scmp.eq.s32.totalorder %s22, 1
      %p71 = por %p69, %p70
      %p73 = scmp.ne.s32.totalorder %s56, %s72
      %p74 = scmp.eq.s32.totalorder %s22, 0
      %p75 = por %p73, %p74
      %s77 = sadd.s32 %s76, 1
      %p80 = scmp.eq.s32.totalorder %s16, 1
      %p81 = scmp.ne.s32.totalorder %s76, %s78
      %p82 = scmp.eq.s32.totalorder %s16, 0
      %p83 = por %p81, %p82
      %p84 = scmp.ne.s32.totalorder %s76, %s78
      %p85 = scmp.eq.s32.totalorder %s21, 1
      %p86 = por %p84, %p85
      %p87 = scmp.ne.s32.totalorder %s78, %s79
      %p88 = scmp.eq.s32.totalorder %s21, 0
      %p89 = por %p87, %p88
      %p90 = scmp.ne.s32.totalorder %s78, %s79
      %p91 = scmp.eq.s32.totalorder %s22, 1
      %p92 = por %p90, %p91
      %p94 = scmp.ne.s32.totalorder %s79, %s93
      %p95 = scmp.eq.s32.totalorder %s22, 0
      %p96 = por %p94, %p95
      %s98 = sadd.s32 %s97, 1
      %p101 = scmp.eq.s32.totalorder %s16, 1
      %p102 = scmp.ne.s32.totalorder %s97, %s99
      %p103 = scmp.eq.s32.totalorder %s16, 0
      %p104 = por %p102, %p103
      %p105 = scmp.ne.s32.totalorder %s97, %s99
      %p106 = scmp.eq.s32.totalorder %s21, 1
      %p107 = por %p105, %p106
      %p108 = scmp.ne.s32.totalorder %s99, %s100
      %p109 = scmp.eq.s32.totalorder %s21, 0
      %p110 = por %p108, %p109
      %p111 = scmp.ne.s32.totalorder %s99, %s100
      %p112 = scmp.eq.s32.totalorder %s22, 1
      %p113 = por %p111, %p112
      %p115 = scmp.ne.s32.totalorder %s100, %s114
      %p116 = scmp.eq.s32.totalorder %s22, 0
      %p117 = por %p115, %p116
      %s119 = sadd.s32 %s118, 1
      %p122 = scmp.eq.s32.totalorder %s16, 1
      %p123 = scmp.ne.s32.totalorder %s118, %s120
      %p124 = scmp.eq.s32.totalorder %s16, 0
      %p125 = por %p123, %p124
      %p126 = scmp.ne.s32.totalorder %s118, %s120
      %p127 = scmp.eq.s32.totalorder %s21, 1
      %p128 = por %p126, %p127
      %p129 = scmp.ne.s32.totalorder %s120, %s121
      %p130 = scmp.eq.s32.totalorder %s21, 0
      %p131 = por %p129, %p130
      %p132 = scmp.ne.s32.totalorder %s120, %s121
      %p133 = scmp.eq.s32.totalorder %s22, 1
      %p134 = por %p132, %p133
      %p136 = scmp.ne.s32.totalorder %s121, %s135
      %p137 = scmp.eq.s32.totalorder %s22, 0
      %p138 = por %p136, %p137
      %s140 = sadd.s32 %s139, 1
      %p143 = scmp.eq.s32.totalorder %s16, 1
      %p144 = scmp.ne.s32.totalorder %s139, %s141
      %p145 = scmp.eq.s32.totalorder %s16, 0
      %p146 = por %p144, %p145
      %p147 = scmp.ne.s32.totalorder %s139, %s141
      %p148 = scmp.eq.s32.totalorder %s21, 1
      %p149 = por %p147, %p148
      %p150 = scmp.ne.s32.totalorder %s141, %s142
      %p151 = scmp.eq.s32.totalorder %s21, 0
      %p152 = por %p150, %p151
      %p153 = scmp.ne.s32.totalorder %s141, %s142
      %p154 = scmp.eq.s32.totalorder %s22, 1
      %p155 = por %p153, %p154
      %p157 = scmp.ne.s32.totalorder %s142, %s156
      %p158 = scmp.eq.s32.totalorder %s22, 0
      %p159 = por %p157, %p158
      %s161 = sadd.s32 %s160, 1
      %p164 = scmp.eq.s32.totalorder %s16, 1
      %p165 = scmp.ne.s32.totalorder %s160, %s162
      %p166 = scmp.eq.s32.totalorder %s16, 0
      %p167 = por %p165, %p166
      %p168 = scmp.ne.s32.totalorder %s160, %s162
      %p169 = scmp.eq.s32.totalorder %s21, 1
      %p170 = por %p168, %p169
      %p171 = scmp.ne.s32.totalorder %s162, %s163
      %p172 = scmp.eq.s32.totalorder %s21, 0
      %p173 = por %p171, %p172
      %p174 = scmp.ne.s32.totalorder %s162, %s163
      %p175 = scmp.eq.s32.totalorder %s22, 1
      %p176 = por %p174, %p175
      %p178 = scmp.ne.s32.totalorder %s163, %s177
      %p179 = scmp.eq.s32.totalorder %s22, 0
      %p180 = por %p178, %p179
      %s181 = ssub.s32 %s16, %s23
      %p182 = scmp.eq.s32.totalorder %s181, 0
      %s184 = sadd.s32 %s183, 1
      %s185 = scalar_select %p182, %s183, %s184
      %p188 = pneg %p182
      %p189 = scmp.eq.s32.totalorder %s16, 1
      %p190 = por %p188, %p189
      %p191 = scmp.ne.s32.totalorder %s183, %s186
      %p192 = scmp.eq.s32.totalorder %s16, 0
      %p193 = por %p191, %p192
      %p194 = scmp.ne.s32.totalorder %s183, %s186
      %p195 = scmp.eq.s32.totalorder %s21, 1
      %p196 = por %p194, %p195
      %p197 = scmp.ne.s32.totalorder %s186, %s187
      %p198 = scmp.eq.s32.totalorder %s21, 0
      %p199 = por %p197, %p198
      %p200 = scmp.ne.s32.totalorder %s186, %s187
      %p201 = scmp.eq.s32.totalorder %s22, 1
      %p202 = por %p200, %p201
      %p204 = scmp.ne.s32.totalorder %s187, %s203
      %p205 = scmp.eq.s32.totalorder %s22, 0
      %p206 = por %p204, %p205
      %p207 = scmp.le.s32.totalorder 1, %s16
      %p208 = scmp.lt.s32.totalorder %s16, 3
      %p209 = pnand %p207, %p208
      %p210 = pneg %p209
      // Predicated region
      $region9: #{tpu_custom_call.1} parent=5 // pred_check
        _
      $region10: #{tpu_custom_call.1} parent=5 // pred_check_branch
        %212 = sbr.rel (%p209) target = $region12
      $region11: #{tpu_custom_call.1} parent=5 // pred_region
        %s213 = ssub.s32 %s16, 1
        // Predicated region
        $region13: #{tpu_custom_call.1} parent=11 // pred_check
          %p214 = pneg %p89
        $region14: #{tpu_custom_call.1} parent=11 // pred_check_branch
          %216 = sbr.rel (%p214) target = $region16
        $region15: #{tpu_custom_call.1} parent=11 // pred_region
          _
        $region16: #{tpu_custom_call.1} parent=11 // pred_fallthru
          _
        // Predicated region
        $region17: #{tpu_custom_call.1} parent=11 // pred_check
          %p217 = pneg %p110
        $region18: #{tpu_custom_call.1} parent=11 // pred_check_branch
          %219 = sbr.rel (%p217) target = $region20
        $region19: #{tpu_custom_call.1} parent=11 // pred_region
          _
        $region20: #{tpu_custom_call.1} parent=11 // pred_fallthru
          _
        // Predicated region
        $region21: #{tpu_custom_call.1} parent=11 // pred_check
          %p220 = pneg %p131
        $region22: #{tpu_custom_call.1} parent=11 // pred_check_branch
          %222 = sbr.rel (%p220) target = $region24
        $region23: #{tpu_custom_call.1} parent=11 // pred_region
          _
        $region24: #{tpu_custom_call.1} parent=11 // pred_fallthru
          _
        // Predicated region
        $region25: #{tpu_custom_call.1} parent=11 // pred_check
          %p223 = pneg %p152
        $region26: #{tpu_custom_call.1} parent=11 // pred_check_branch
          %225 = sbr.rel (%p223) target = $region28
        $region27: #{tpu_custom_call.1} parent=11 // pred_region
          _
        $region28: #{tpu_custom_call.1} parent=11 // pred_fallthru
          _
        // Predicated region
        $region29: #{tpu_custom_call.1} parent=11 // pred_check
          %p226 = pneg %p173
        $region30: #{tpu_custom_call.1} parent=11 // pred_check_branch
          %228 = sbr.rel (%p226) target = $region32
        $region31: #{tpu_custom_call.1} parent=11 // pred_region
          _
        $region32: #{tpu_custom_call.1} parent=11 // pred_fallthru
          _
      $region12: #{tpu_custom_call.1} parent=5 // pred_fallthru
        _
      %p229 = scmp.lt.s32.totalorder %s16, 2
      // Predicated region
      $region33: #{tpu_custom_call.1} parent=5 // pred_check
        %p230 = pneg %p229
      $region34: #{tpu_custom_call.1} parent=5 // pred_check_branch
        %232 = sbr.rel (%p230) target = $region36
      $region35: #{tpu_custom_call.1} parent=5 // pred_region
        // Predicated region
        $region37: #{tpu_custom_call.1} parent=35 // pred_check
          %p233 = pneg %p36
        $region38: #{tpu_custom_call.1} parent=35 // pred_check_branch
          %235 = sbr.rel (%p233) target = $region40
        $region39: #{tpu_custom_call.1} parent=35 // pred_region
          %s236 = smul.u32 64, %s16
          %p237 = scmp.lt.s32.totalorder %s236, 127
          %s238 = scalar_select %p237, %s236, 127
          %s239 = smul.addr %s238, 8
          %s240 = scalar_lea.vmem %s0, %s239
          %s241 = smul.u32 64, %s16
        $region40: #{tpu_custom_call.1} parent=35 // pred_fallthru
          _
        // Predicated region
        $region41: #{tpu_custom_call.1} parent=35 // pred_check
          %p242 = pneg %p62
        $region42: #{tpu_custom_call.1} parent=35 // pred_check_branch
          %244 = sbr.rel (%p242) target = $region44
        $region43: #{tpu_custom_call.1} parent=35 // pred_region
          %s245 = smul.u32 4, %s16
          %p246 = scmp.lt.s32.totalorder %s245, 7
          %s247 = scalar_select %p246, %s245, 7
          %s248 = scalar_lea.vmem %s1, %s247
          %s249 = smul.u32 4, %s16
        $region44: #{tpu_custom_call.1} parent=35 // pred_fallthru
          _
      $region36: #{tpu_custom_call.1} parent=5 // pred_fallthru
        _
      %p250 = scmp.le.s32.totalorder 1, %s16
      %p251 = scmp.lt.s32.totalorder %s16, 3
      %p252 = pnand %p250, %p251
      %p253 = pneg %p252
      // Predicated region
      $region45: #{tpu_custom_call.1} parent=5 // pred_check
        _
      $region46: #{tpu_custom_call.1} parent=5 // pred_check_branch
        %255 = sbr.rel (%p252) target = $region48
      $region47: #{tpu_custom_call.1} parent=5 // pred_region
        %s256 = ssub.s32 %s16, 1
        %s257 = smul.u32 64, %s21
        %p258 = scmp.lt.s32.totalorder %s257, 127
        %s259 = scalar_select %p258, %s257, 127
        %s260 = smul.addr %s259, 8
        %s261 = scalar_lea.vmem %s0, %s260
        %p262 = pneg %p42
        %p263 = pneg %p39
        %s264 = smul.u32 4, %s21
        %p265 = scmp.lt.s32.totalorder %s264, 7
        %s266 = scalar_select %p265, %s264, 7
        %s267 = scalar_lea.vmem %s1, %s266
        %p268 = pneg %p68
        %p269 = pneg %p65
        %p270 = pneg %p89
        %p271 = pneg %p86
        %p272 = pneg %p110
        %p273 = pneg %p107
        %p274 = pneg %p131
        %p275 = pneg %p128
        %p276 = pneg %p152
        %p277 = pneg %p149
        %p278 = pneg %p173
        %p279 = pneg %p170
        %p280 = pneg %p199
        %p281 = pneg %p196
        %s282 = sand.u32 %s186, 1
        %s283 = scalar_lea.sflag [#allocation3], %s282
        %s284 = sand.u32 %s186, 1
        %s285 = smul.addr %s284, 4
        %s286 = scalar_lea.vmem [#allocation2], %s285
        %s287 = smul.u32 64, %s21
        %p288 = scmp.lt.s32.totalorder %s287, 127
        %s289 = scalar_select %p288, %s287, 127
        %s290 = smul.addr %s289, 8
        %s291 = scalar_lea.vmem %s0, %s290
        %s292 = smul.u32 64, %s21
        %s293 = smul.u32 4, %s21
        %p294 = scmp.lt.s32.totalorder %s293, 7
        %s295 = scalar_select %p294, %s293, 7
        %s296 = scalar_lea.vmem %s1, %s295
        %s297 = smul.u32 4, %s21
        %s298 = smul.u32 4, %s21
        %v300 = vld [vmem:[%s291] sm:$0xff]
        %v301 = vld [vmem:[%s291 + $0x8] sm:$0xff]
        %v302 = vld [vmem:[%s291 + $0x10] sm:$0xff]
        %v303 = vld [vmem:[%s291 + $0x18] sm:$0xff]
        %v304 = vld [vmem:[%s291 + $0x20] sm:$0xff]
        %v305 = vld [vmem:[%s291 + $0x28] sm:$0xff]
        %v306 = vld [vmem:[%s291 + $0x30] sm:$0xff]
        %v307 = vld [vmem:[%s291 + $0x38] sm:$0xff]
        %v308 = vld [vmem:[%s291 + $0x40] sm:$0xff]
        %v309 = vld [vmem:[%s291 + $0x48] sm:$0xff]
        %v310 = vld [vmem:[%s291 + $0x50] sm:$0xff]
        %v311 = vld [vmem:[%s291 + $0x58] sm:$0xff]
        %v312 = vld [vmem:[%s291 + $0x60] sm:$0xff]
        %v313 = vld [vmem:[%s291 + $0x68] sm:$0xff]
        %v314 = vld [vmem:[%s291 + $0x70] sm:$0xff]
        %v315 = vld [vmem:[%s291 + $0x78] sm:$0xff]
        %v316 = vld [vmem:[%s291 + $0x80] sm:$0xff]
        %v317 = vld [vmem:[%s291 + $0x88] sm:$0xff]
        %v318 = vld [vmem:[%s291 + $0x90] sm:$0xff]
        %v319 = vld [vmem:[%s291 + $0x98] sm:$0xff]
        %v320 = vld [vmem:[%s291 + $0xa0] sm:$0xff]
        %v321 = vld [vmem:[%s291 + $0xa8] sm:$0xff]
        %v322 = vld [vmem:[%s291 + $0xb0] sm:$0xff]
        %v323 = vld [vmem:[%s291 + $0xb8] sm:$0xff]
        %v324 = vld [vmem:[%s291 + $0xc0] sm:$0xff]
        %v325 = vld [vmem:[%s291 + $0xc8] sm:$0xff]
        %v326 = vld [vmem:[%s291 + $0xd0] sm:$0xff]
        %v327 = vld [vmem:[%s291 + $0xd8] sm:$0xff]
        %v328 = vld [vmem:[%s291 + $0xe0] sm:$0xff]
        %v329 = vld [vmem:[%s291 + $0xe8] sm:$0xff]
        %v330 = vld [vmem:[%s291 + $0xf0] sm:$0xff]
        %v331 = vld [vmem:[%s291 + $0xf8] sm:$0xff]
        %v332 = vld [vmem:[%s291 + $0x100] sm:$0xff]
        %v333 = vld [vmem:[%s291 + $0x108] sm:$0xff]
        %v334 = vld [vmem:[%s291 + $0x110] sm:$0xff]
        %v335 = vld [vmem:[%s291 + $0x118] sm:$0xff]
        %v336 = vld [vmem:[%s291 + $0x120] sm:$0xff]
        %v337 = vld [vmem:[%s291 + $0x128] sm:$0xff]
        %v338 = vld [vmem:[%s291 + $0x130] sm:$0xff]
        %v339 = vld [vmem:[%s291 + $0x138] sm:$0xff]
        %v340 = vld [vmem:[%s291 + $0x140] sm:$0xff]
        %v341 = vld [vmem:[%s291 + $0x148] sm:$0xff]
        %v342 = vld [vmem:[%s291 + $0x150] sm:$0xff]
        %v343 = vld [vmem:[%s291 + $0x158] sm:$0xff]
        %v344 = vld [vmem:[%s291 + $0x160] sm:$0xff]
        %v345 = vld [vmem:[%s291 + $0x168] sm:$0xff]
        %v346 = vld [vmem:[%s291 + $0x170] sm:$0xff]
        %v347 = vld [vmem:[%s291 + $0x178] sm:$0xff]
        %v348 = vld [vmem:[%s291 + $0x180] sm:$0xff]
        %v349 = vld [vmem:[%s291 + $0x188] sm:$0xff]
        %v350 = vld [vmem:[%s291 + $0x190] sm:$0xff]
        %v351 = vld [vmem:[%s291 + $0x198] sm:$0xff]
        %v352 = vld [vmem:[%s291 + $0x1a0] sm:$0xff]
        %v353 = vld [vmem:[%s291 + $0x1a8] sm:$0xff]
        %v354 = vld [vmem:[%s291 + $0x1b0] sm:$0xff]
        %v355 = vld [vmem:[%s291 + $0x1b8] sm:$0xff]
        %v356 = vld [vmem:[%s291 + $0x1c0] sm:$0xff]
        %v357 = vld [vmem:[%s291 + $0x1c8] sm:$0xff]
        %v358 = vld [vmem:[%s291 + $0x1d0] sm:$0xff]
        %v359 = vld [vmem:[%s291 + $0x1d8] sm:$0xff]
        %v360 = vld [vmem:[%s291 + $0x1e0] sm:$0xff]
        %v361 = vld [vmem:[%s291 + $0x1e8] sm:$0xff]
        %v362 = vld [vmem:[%s291 + $0x1f0] sm:$0xff]
        %v363 = vld [vmem:[%s291 + $0x1f8] sm:$0xff]
        %364 = vxpose.xlu0.b32.start [1/16] %v300, 128
        %365 = vxpose.xlu0.b32.cont [2/16] %v301, 128
        %366 = vxpose.xlu0.b32.cont [3/16] %v302, 128
        %367 = vxpose.xlu0.b32.cont [4/16] %v303, 128
        %368 = vxpose.xlu0.b32.cont [5/16] %v304, 128
        %369 = vxpose.xlu0.b32.cont [6/16] %v305, 128
        %370 = vxpose.xlu0.b32.cont [7/16] %v306, 128
        %371 = vxpose.xlu0.b32.cont [8/16] %v307, 128
        %372 = vxpose.xlu0.b32.cont [9/16] %v308, 128
        %373 = vxpose.xlu0.b32.cont [10/16] %v309, 128
        %374 = vxpose.xlu0.b32.cont [11/16] %v310, 128
        %375 = vxpose.xlu0.b32.cont [12/16] %v311, 128
        %376 = vxpose.xlu0.b32.cont [13/16] %v312, 128
        %377 = vxpose.xlu0.b32.cont [14/16] %v313, 128
        %378 = vxpose.xlu0.b32.cont [15/16] %v314, 128
        %379 = vxpose.xlu0.b32.end [16/16] %v315, 128
        %v380 = vpop.trf.xlu0
        %v381 = vpop.trf.xlu0
        %v382 = vpop.trf.xlu0
        %v383 = vpop.trf.xlu0
        %v384 = vpop.trf.xlu0
        %v385 = vpop.trf.xlu0
        %v386 = vpop.trf.xlu0
        %v387 = vpop.trf.xlu0
        %v388 = vpop.trf.xlu0
        %v389 = vpop.trf.xlu0
        %v390 = vpop.trf.xlu0
        %v391 = vpop.trf.xlu0
        %v392 = vpop.trf.xlu0
        %v393 = vpop.trf.xlu0
        %v394 = vpop.trf.xlu0
        %v395 = vpop.trf.xlu0
        %396 = vxpose.xlu0.b32.start [1/16] %v316, 128
        %397 = vxpose.xlu0.b32.cont [2/16] %v317, 128
        %398 = vxpose.xlu0.b32.cont [3/16] %v318, 128
        %399 = vxpose.xlu0.b32.cont [4/16] %v319, 128
        %400 = vxpose.xlu0.b32.cont [5/16] %v320, 128
        %401 = vxpose.xlu0.b32.cont [6/16] %v321, 128
        %402 = vxpose.xlu0.b32.cont [7/16] %v322, 128
        %403 = vxpose.xlu0.b32.cont [8/16] %v323, 128
        %404 = vxpose.xlu0.b32.cont [9/16] %v324, 128
        %405 = vxpose.xlu0.b32.cont [10/16] %v325, 128
        %406 = vxpose.xlu0.b32.cont [11/16] %v326, 128
        %407 = vxpose.xlu0.b32.cont [12/16] %v327, 128
        %408 = vxpose.xlu0.b32.cont [13/16] %v328, 128
        %409 = vxpose.xlu0.b32.cont [14/16] %v329, 128
        %410 = vxpose.xlu0.b32.cont [15/16] %v330, 128
        %411 = vxpose.xlu0.b32.end [16/16] %v331, 128
        %v412 = vpop.trf.xlu0
        %v413 = vpop.trf.xlu0
        %v414 = vpop.trf.xlu0
        %v415 = vpop.trf.xlu0
        %v416 = vpop.trf.xlu0
        %v417 = vpop.trf.xlu0
        %v418 = vpop.trf.xlu0
        %v419 = vpop.trf.xlu0
        %v420 = vpop.trf.xlu0
        %v421 = vpop.trf.xlu0
        %v422 = vpop.trf.xlu0
        %v423 = vpop.trf.xlu0
        %v424 = vpop.trf.xlu0
        %v425 = vpop.trf.xlu0
        %v426 = vpop.trf.xlu0
        %v427 = vpop.trf.xlu0
        %428 = vxpose.xlu0.b32.start [1/16] %v332, 128
        %429 = vxpose.xlu0.b32.cont [2/16] %v333, 128
        %430 = vxpose.xlu0.b32.cont [3/16] %v334, 128
        %431 = vxpose.xlu0.b32.cont [4/16] %v335, 128
        %432 = vxpose.xlu0.b32.cont [5/16] %v336, 128
        %433 = vxpose.xlu0.b32.cont [6/16] %v337, 128
        %434 = vxpose.xlu0.b32.cont [7/16] %v338, 128
        %435 = vxpose.xlu0.b32.cont [8/16] %v339, 128
        %436 = vxpose.xlu0.b32.cont [9/16] %v340, 128
        %437 = vxpose.xlu0.b32.cont [10/16] %v341, 128
        %438 = vxpose.xlu0.b32.cont [11/16] %v342, 128
        %439 = vxpose.xlu0.b32.cont [12/16] %v343, 128
        %440 = vxpose.xlu0.b32.cont [13/16] %v344, 128
        %441 = vxpose.xlu0.b32.cont [14/16] %v345, 128
        %442 = vxpose.xlu0.b32.cont [15/16] %v346, 128
        %443 = vxpose.xlu0.b32.end [16/16] %v347, 128
        %v444 = vpop.trf.xlu0
        %v445 = vpop.trf.xlu0
        %v446 = vpop.trf.xlu0
        %v447 = vpop.trf.xlu0
        %v448 = vpop.trf.xlu0
        %v449 = vpop.trf.xlu0
        %v450 = vpop.trf.xlu0
        %v451 = vpop.trf.xlu0
        %v452 = vpop.trf.xlu0
        %v453 = vpop.trf.xlu0
        %v454 = vpop.trf.xlu0
        %v455 = vpop.trf.xlu0
        %v456 = vpop.trf.xlu0
        %v457 = vpop.trf.xlu0
        %v458 = vpop.trf.xlu0
        %v459 = vpop.trf.xlu0
        %460 = vxpose.xlu0.b32.start [1/16] %v348, 128
        %461 = vxpose.xlu0.b32.cont [2/16] %v349, 128
        %462 = vxpose.xlu0.b32.cont [3/16] %v350, 128
        %463 = vxpose.xlu0.b32.cont [4/16] %v351, 128
        %464 = vxpose.xlu0.b32.cont [5/16] %v352, 128
        %465 = vxpose.xlu0.b32.cont [6/16] %v353, 128
        %466 = vxpose.xlu0.b32.cont [7/16] %v354, 128
        %467 = vxpose.xlu0.b32.cont [8/16] %v355, 128
        %468 = vxpose.xlu0.b32.cont [9/16] %v356, 128
        %469 = vxpose.xlu0.b32.cont [10/16] %v357, 128
        %470 = vxpose.xlu0.b32.cont [11/16] %v358, 128
        %471 = vxpose.xlu0.b32.cont [12/16] %v359, 128
        %472 = vxpose.xlu0.b32.cont [13/16] %v360, 128
        %473 = vxpose.xlu0.b32.cont [14/16] %v361, 128
        %474 = vxpose.xlu0.b32.cont [15/16] %v362, 128
        %475 = vxpose.xlu0.b32.end [16/16] %v363, 128
        %v476 = vpop.trf.xlu0
        %v477 = vpop.trf.xlu0
        %v478 = vpop.trf.xlu0
        %v479 = vpop.trf.xlu0
        %v480 = vpop.trf.xlu0
        %v481 = vpop.trf.xlu0
        %v482 = vpop.trf.xlu0
        %v483 = vpop.trf.xlu0
        %v484 = vpop.trf.xlu0
        %v485 = vpop.trf.xlu0
        %v486 = vpop.trf.xlu0
        %v487 = vpop.trf.xlu0
        %v488 = vpop.trf.xlu0
        %v489 = vpop.trf.xlu0
        %v490 = vpop.trf.xlu0
        %v491 = vpop.trf.xlu0
        %v492 = vld [vmem:[%s296] sm:$0xf]
        %v493 = vld [vmem:[%s2] sm:$0xf]
        %v494 = vld [vmem:[%s2 + $0x4] sm:$0xf]
        %v495 = vld [vmem:[%s2 + $0x8] sm:$0xf]
        %v496 = vld [vmem:[%s2 + $0xc] sm:$0xf]
        %v497 = vpack.c.bf16 %v381, %v380
        %v498 = vpack.c.bf16 %v413, %v412
        %v499 = vpack.c.bf16 %v445, %v444
        %v500 = vpack.c.bf16 %v477, %v476
        %v501 = vpack.c.bf16 %v383, %v382
        %v502 = vpack.c.bf16 %v415, %v414
        %v503 = vpack.c.bf16 %v447, %v446
        %v504 = vpack.c.bf16 %v479, %v478
        %v505 = vld [vmem:[%s3] sm:$0xff]
        %v506 = vld [vmem:[%s3 + $0x8] sm:$0xff]
        %v507 = vld [vmem:[%s3 + $0x10] sm:$0xff]
        %v508 = vld [vmem:[%s3 + $0x18] sm:$0xff]
        %510 = vset.pattern.permute.xlu0 0
        %511 = vperm.xlu0 %510, %v505
        %v512 = vpop.permute.xlu0 %511
        %515 = vset.pattern.permute.xlu0 0
        %516 = vperm.xlu0 %515, %v506
        %v517 = vpop.permute.xlu0 %516
        %520 = vset.pattern.permute.xlu0 0
        %521 = vperm.xlu0 %520, %v507
        %v522 = vpop.permute.xlu0 %521
        %525 = vset.pattern.permute.xlu0 0
        %526 = vperm.xlu0 %525, %v508
        %v527 = vpop.permute.xlu0 %526
        %v530 = vperm.slane %v492, 0
        %v531 = vperm.slane %v492, 1
        %v532 = vperm.slane %v492, 2
        %v533 = vperm.slane %v492, 3
        %v538 = vmul.f32 %v512, %v530
        %v539 = vmul.f32 %v512, %v531
        %v540 = vmul.f32 %v512, %v532
        %v541 = vmul.f32 %v512, %v533
        %v542 = vmul.f32 %v517, %v530
        %v543 = vmul.f32 %v517, %v531
        %v544 = vmul.f32 %v517, %v532
        %v545 = vmul.f32 %v517, %v533
        %v546 = vmul.f32 %v522, %v530
        %v547 = vmul.f32 %v522, %v531
        %v548 = vmul.f32 %v522, %v532
        %v549 = vmul.f32 %v522, %v533
        %v550 = vmul.f32 %v527, %v530
        %v551 = vmul.f32 %v527, %v531
        %v552 = vmul.f32 %v527, %v532
        %v553 = vmul.f32 %v527, %v533
        %v558 = vunpack.c.l.b16 %v493
        %v559 = vunpack.c.l.b16 %v494
        %v560 = vunpack.c.l.b16 %v495
        %v561 = vunpack.c.l.b16 %v496
        %v562 = vpack.c.b16 %v559, %v558
        %v563 = vpack.c.b16 %v561, %v560
        %vm564 = vcmask 261120
        %v566 = vsel %vm564, %v562, 0
        %v569 = vsel %vm564, %v563, 0
        %571 = vmatpush.bf16.msra.mxu0 0
        %572 = vmatpush.bf16.msra.mxu0 0
        %573 = vmatpush.bf16.msra.mxu0 0
        %574 = vmatpush.bf16.msra.mxu0 0
        %575 = vmatpush.bf16.msra.mxu0 0
        %576 = vmatpush.bf16.msra.mxu0 0
        %577 = vmatpush.bf16.msra.mxu0 %v501
        %578 = vmatpush.bf16.msra.mxu0 %v497
        %579 = vmatmul.bf16.gmra.mxu0 %v566
        %v580 = vpop.f32.mrf.mxu0
        %v581 = vadd.f32 %v538, %v580
        %v582 = vpop.f32.mrf.mxu0
        %v583 = vadd.f32 %v542, %v582
        %584 = vmatmul.bf16.gmra.mxu0 %v569
        %v585 = vpop.f32.mrf.mxu0
        %v586 = vadd.f32 %v546, %v585
        %v587 = vpop.f32.mrf.mxu0
        %v588 = vadd.f32 %v550, %v587
        %589 = vdwg.mxu0
        %590 = vmatpush.bf16.msra.mxu0 0
        %591 = vmatpush.bf16.msra.mxu0 0
        %592 = vmatpush.bf16.msra.mxu0 0
        %593 = vmatpush.bf16.msra.mxu0 0
        %594 = vmatpush.bf16.msra.mxu0 0
        %595 = vmatpush.bf16.msra.mxu0 0
        %596 = vmatpush.bf16.msra.mxu0 %v502
        %597 = vmatpush.bf16.msra.mxu0 %v498
        %598 = vmatmul.bf16.gmra.mxu0 %v566
        %v599 = vpop.f32.mrf.mxu0
        %v600 = vadd.f32 %v539, %v599
        %v601 = vpop.f32.mrf.mxu0
        %v602 = vadd.f32 %v543, %v601
        %603 = vmatmul.bf16.gmra.mxu0 %v569
        %v604 = vpop.f32.mrf.mxu0
        %v605 = vadd.f32 %v547, %v604
        %v606 = vpop.f32.mrf.mxu0
        %v607 = vadd.f32 %v551, %v606
        %608 = vdwg.mxu0
        %609 = vmatpush.bf16.msra.mxu0 0
        %610 = vmatpush.bf16.msra.mxu0 0
        %611 = vmatpush.bf16.msra.mxu0 0
        %612 = vmatpush.bf16.msra.mxu0 0
        %613 = vmatpush.bf16.msra.mxu0 0
        %614 = vmatpush.bf16.msra.mxu0 0
        %615 = vmatpush.bf16.msra.mxu0 %v503
        %616 = vmatpush.bf16.msra.mxu0 %v499
        %617 = vmatmul.bf16.gmra.mxu0 %v566
        %v618 = vpop.f32.mrf.mxu0
        %v619 = vadd.f32 %v540, %v618
        %v620 = vpop.f32.mrf.mxu0
        %v621 = vadd.f32 %v544, %v620
        %622 = vmatmul.bf16.gmra.mxu0 %v569
        %v623 = vpop.f32.mrf.mxu0
        %v624 = vadd.f32 %v548, %v623
        %v625 = vpop.f32.mrf.mxu0
        %v626 = vadd.f32 %v552, %v625
        %627 = vdwg.mxu0
        %628 = vmatpush.bf16.msra.mxu0 0
        %629 = vmatpush.bf16.msra.mxu0 0
        %630 = vmatpush.bf16.msra.mxu0 0
        %631 = vmatpush.bf16.msra.mxu0 0
        %632 = vmatpush.bf16.msra.mxu0 0
        %633 = vmatpush.bf16.msra.mxu0 0
        %634 = vmatpush.bf16.msra.mxu0 %v504
        %635 = vmatpush.bf16.msra.mxu0 %v500
        %636 = vmatmul.bf16.gmra.mxu0 %v566
        %v637 = vpop.f32.mrf.mxu0
        %v638 = vadd.f32 %v541, %v637
        %v639 = vpop.f32.mrf.mxu0
        %v640 = vadd.f32 %v545, %v639
        %641 = vmatmul.bf16.gmra.mxu0 %v569
        %v642 = vpop.f32.mrf.mxu0
        %v643 = vadd.f32 %v549, %v642
        %v644 = vpop.f32.mrf.mxu0
        %v645 = vadd.f32 %v553, %v644
        %646 = vdwg.mxu0
        %v647 = vld [vmem:[%s4] sm:$0xff]
        %v648 = vld [vmem:[%s4 + $0x8] sm:$0xff]
        %v649 = vld [vmem:[%s4 + $0x10] sm:$0xff]
        %v650 = vld [vmem:[%s4 + $0x18] sm:$0xff]
        %652 = vset.pattern.permute.xlu0 0
        %653 = vperm.xlu0 %652, %v647
        %v654 = vpop.permute.xlu0 %653
        %657 = vset.pattern.permute.xlu0 0
        %658 = vperm.xlu0 %657, %v648
        %v659 = vpop.permute.xlu0 %658
        %662 = vset.pattern.permute.xlu0 0
        %663 = vperm.xlu0 %662, %v649
        %v664 = vpop.permute.xlu0 %663
        %667 = vset.pattern.permute.xlu0 0
        %668 = vperm.xlu0 %667, %v650
        %v669 = vpop.permute.xlu0 %668
        %v671 = vadd.f32 %v581, %v654
        %v672 = vadd.f32 %v600, %v654
        %v673 = vadd.f32 %v619, %v654
        %v674 = vadd.f32 %v638, %v654
        %v675 = vadd.f32 %v583, %v659
        %v676 = vadd.f32 %v602, %v659
        %v677 = vadd.f32 %v621, %v659
        %v678 = vadd.f32 %v640, %v659
        %v679 = vadd.f32 %v586, %v664
        %v680 = vadd.f32 %v605, %v664
        %v681 = vadd.f32 %v624, %v664
        %v682 = vadd.f32 %v643, %v664
        %v683 = vadd.f32 %v588, %v669
        %v684 = vadd.f32 %v607, %v669
        %v685 = vadd.f32 %v626, %v669
        %v686 = vadd.f32 %v645, %v669
        %v687 = vtanh.pop %v671
        %v688 = vtanh.pop %v672
        %v689 = vtanh.pop %v673
        %v690 = vtanh.pop %v674
        %v691 = vtanh.pop %v675
        %v692 = vtanh.pop %v676
        %v693 = vtanh.pop %v677
        %v694 = vtanh.pop %v678
        %v695 = vtanh.pop %v679
        %v696 = vtanh.pop %v680
        %v697 = vtanh.pop %v681
        %v698 = vtanh.pop %v682
        %v699 = vtanh.pop %v683
        %v700 = vtanh.pop %v684
        %v701 = vtanh.pop %v685
        %v702 = vtanh.pop %v686
        %v703 = vld [vmem:[%s5] sm:$0xf]
        %v704 = vld [vmem:[%s5 + $0x4] sm:$0xf]
        %v705 = vld [vmem:[%s5 + $0x8] sm:$0xf]
        %v706 = vld [vmem:[%s5 + $0xc] sm:$0xf]
        %v707 = vpack.c.bf16 %v691, %v687
        %v708 = vpack.c.bf16 %v692, %v688
        %v709 = vpack.c.bf16 %v693, %v689
        %v710 = vpack.c.bf16 %v694, %v690
        %v711 = vpack.c.bf16 %v699, %v695
        %v712 = vpack.c.bf16 %v700, %v696
        %v713 = vpack.c.bf16 %v701, %v697
        %v714 = vpack.c.bf16 %v702, %v698
        %v715 = vld [vmem:[%s6] sm:$0xff]
        %v716 = vld [vmem:[%s6 + $0x8] sm:$0xff]
        %v717 = vld [vmem:[%s6 + $0x10] sm:$0xff]
        %v718 = vld [vmem:[%s6 + $0x18] sm:$0xff]
        %720 = vset.pattern.permute.xlu0 0
        %721 = vperm.xlu0 %720, %v715
        %v722 = vpop.permute.xlu0 %721
        %725 = vset.pattern.permute.xlu0 0
        %726 = vperm.xlu0 %725, %v716
        %v727 = vpop.permute.xlu0 %726
        %730 = vset.pattern.permute.xlu0 0
        %731 = vperm.xlu0 %730, %v717
        %v732 = vpop.permute.xlu0 %731
        %735 = vset.pattern.permute.xlu0 0
        %736 = vperm.xlu0 %735, %v718
        %v737 = vpop.permute.xlu0 %736
        %v743 = vunpack.c.l.b16 %v703
        %v744 = vunpack.c.l.b16 %v704
        %v745 = vunpack.c.l.b16 %v705
        %v746 = vunpack.c.l.b16 %v706
        %v747 = vpack.c.b16 %v744, %v743
        %v748 = vpack.c.b16 %v746, %v745
        %v750 = vsel %vm564, %v747, 0
        %v753 = vsel %vm564, %v748, 0
        %755 = vmatpush.bf16.msra.mxu0 0
        %756 = vmatpush.bf16.msra.mxu0 0
        %757 = vmatpush.bf16.msra.mxu0 0
        %758 = vmatpush.bf16.msra.mxu0 0
        %759 = vmatpush.bf16.msra.mxu0 0
        %760 = vmatpush.bf16.msra.mxu0 0
        %761 = vmatpush.bf16.msra.mxu0 %v711
        %762 = vmatpush.bf16.msra.mxu0 %v707
        %763 = vmatmul.bf16.gmra.mxu0 %v750
        %v764 = vpop.f32.mrf.mxu0
        %v765 = vadd.f32 %v722, %v764
        %v766 = vpop.f32.mrf.mxu0
        %v767 = vadd.f32 %v727, %v766
        %768 = vmatmul.bf16.gmra.mxu0 %v753
        %v769 = vpop.f32.mrf.mxu0
        %v770 = vadd.f32 %v732, %v769
        %v771 = vpop.f32.mrf.mxu0
        %v772 = vadd.f32 %v737, %v771
        %773 = vdwg.mxu0
        %774 = vmatpush.bf16.msra.mxu0 0
        %775 = vmatpush.bf16.msra.mxu0 0
        %776 = vmatpush.bf16.msra.mxu0 0
        %777 = vmatpush.bf16.msra.mxu0 0
        %778 = vmatpush.bf16.msra.mxu0 0
        %779 = vmatpush.bf16.msra.mxu0 0
        %780 = vmatpush.bf16.msra.mxu0 %v712
        %781 = vmatpush.bf16.msra.mxu0 %v708
        %782 = vmatmul.bf16.gmra.mxu0 %v750
        %v783 = vpop.f32.mrf.mxu0
        %v784 = vadd.f32 %v722, %v783
        %v785 = vpop.f32.mrf.mxu0
        %v786 = vadd.f32 %v727, %v785
        %787 = vmatmul.bf16.gmra.mxu0 %v753
        %v788 = vpop.f32.mrf.mxu0
        %v789 = vadd.f32 %v732, %v788
        %v790 = vpop.f32.mrf.mxu0
        %v791 = vadd.f32 %v737, %v790
        %792 = vdwg.mxu0
        %793 = vmatpush.bf16.msra.mxu0 0
        %794 = vmatpush.bf16.msra.mxu0 0
        %795 = vmatpush.bf16.msra.mxu0 0
        %796 = vmatpush.bf16.msra.mxu0 0
        %797 = vmatpush.bf16.msra.mxu0 0
        %798 = vmatpush.bf16.msra.mxu0 0
        %799 = vmatpush.bf16.msra.mxu0 %v713
        %800 = vmatpush.bf16.msra.mxu0 %v709
        %801 = vmatmul.bf16.gmra.mxu0 %v750
        %v802 = vpop.f32.mrf.mxu0
        %v803 = vadd.f32 %v722, %v802
        %v804 = vpop.f32.mrf.mxu0
        %v805 = vadd.f32 %v727, %v804
        %806 = vmatmul.bf16.gmra.mxu0 %v753
        %v807 = vpop.f32.mrf.mxu0
        %v808 = vadd.f32 %v732, %v807
        %v809 = vpop.f32.mrf.mxu0
        %v810 = vadd.f32 %v737, %v809
        %811 = vdwg.mxu0
        %812 = vmatpush.bf16.msra.mxu0 0
        %813 = vmatpush.bf16.msra.mxu0 0
        %814 = vmatpush.bf16.msra.mxu0 0
        %815 = vmatpush.bf16.msra.mxu0 0
        %816 = vmatpush.bf16.msra.mxu0 0
        %817 = vmatpush.bf16.msra.mxu0 0
        %818 = vmatpush.bf16.msra.mxu0 %v714
        %819 = vmatpush.bf16.msra.mxu0 %v710
        %820 = vmatmul.bf16.gmra.mxu0 %v750
        %v821 = vpop.f32.mrf.mxu0
        %v822 = vadd.f32 %v722, %v821
        %v823 = vpop.f32.mrf.mxu0
        %v824 = vadd.f32 %v727, %v823
        %825 = vmatmul.bf16.gmra.mxu0 %v753
        %v826 = vpop.f32.mrf.mxu0
        %v827 = vadd.f32 %v732, %v826
        %v828 = vpop.f32.mrf.mxu0
        %v829 = vadd.f32 %v737, %v828
        %830 = vdwg.mxu0
        %v831 = vsub.f32 %v380, %v765
        %v832 = vsub.f32 %v412, %v784
        %v833 = vsub.f32 %v444, %v803
        %v834 = vsub.f32 %v476, %v822
        %v835 = vsub.f32 %v381, %v767
        %v836 = vsub.f32 %v413, %v786
        %v837 = vsub.f32 %v445, %v805
        %v838 = vsub.f32 %v477, %v824
        %v839 = vsub.f32 %v382, %v770
        %v840 = vsub.f32 %v414, %v789
        %v841 = vsub.f32 %v446, %v808
        %v842 = vsub.f32 %v478, %v827
        %v843 = vsub.f32 %v383, %v772
        %v844 = vsub.f32 %v415, %v791
        %v845 = vsub.f32 %v447, %v810
        %v846 = vsub.f32 %v479, %v829
        %v847 = vmul.f32 %v831, %v831
        %v848 = vmul.f32 %v832, %v832
        %v849 = vmul.f32 %v833, %v833
        %v850 = vmul.f32 %v834, %v834
        %v851 = vmul.f32 %v835, %v835
        %v852 = vmul.f32 %v836, %v836
        %v853 = vmul.f32 %v837, %v837
        %v854 = vmul.f32 %v838, %v838
        %v855 = vmul.f32 %v839, %v839
        %v856 = vmul.f32 %v840, %v840
        %v857 = vmul.f32 %v841, %v841
        %v858 = vmul.f32 %v842, %v842
        %v859 = vmul.f32 %v843, %v843
        %v860 = vmul.f32 %v844, %v844
        %v861 = vmul.f32 %v845, %v845
        %v862 = vmul.f32 %v846, %v846
        %v863 = vadd.f32 %v847, %v851
        %v864 = vadd.f32 %v863, %v855
        %v865 = vadd.f32 %v864, %v859
        %v866 = vrot.slane %v865, 4
        %v867 = vadd.f32 %v865, %v866
        %v868 = vrot.slane %v867, 2
        %v869 = vadd.f32 %v867, %v868
        %v870 = vrot.slane %v869, 1
        %v871 = vadd.f32 %v869, %v870
        %v872 = vadd.f32 %v848, %v852
        %v873 = vadd.f32 %v872, %v856
        %v874 = vadd.f32 %v873, %v860
        %v875 = vrot.slane %v874, 4
        %v876 = vadd.f32 %v874, %v875
        %v877 = vrot.slane %v876, 2
        %v878 = vadd.f32 %v876, %v877
        %v879 = vrot.slane %v878, 1
        %v880 = vadd.f32 %v878, %v879
        %v881 = vadd.f32 %v849, %v853
        %v882 = vadd.f32 %v881, %v857
        %v883 = vadd.f32 %v882, %v861
        %v884 = vrot.slane %v883, 4
        %v885 = vadd.f32 %v883, %v884
        %v886 = vrot.slane %v885, 2
        %v887 = vadd.f32 %v885, %v886
        %v888 = vrot.slane %v887, 1
        %v889 = vadd.f32 %v887, %v888
        %v890 = vadd.f32 %v850, %v854
        %v891 = vadd.f32 %v890, %v858
        %v892 = vadd.f32 %v891, %v862
        %v893 = vrot.slane %v892, 4
        %v894 = vadd.f32 %v892, %v893
        %v895 = vrot.slane %v894, 2
        %v896 = vadd.f32 %v894, %v895
        %v897 = vrot.slane %v896, 1
        %v898 = vadd.f32 %v896, %v897
        %v899 = vmul.f32 %v871, 0.5
        %v900 = vmul.f32 %v880, 0.5
        %v901 = vmul.f32 %v889, 0.5
        %v902 = vmul.f32 %v898, 0.5
        %v907 = vrot.slane %v900, 7
        %v908 = vrot.slane %v901, 6
        %v909 = vrot.slane %v902, 5
        %vm910 = vcmask 1040384
        %v911 = vsel %vm910, %v899, %v907
        %vm912 = vcmask 1042434
        %v913 = vsel %vm912, %v908, %v909
        %vm914 = vcmask 1041408
        %v915 = vsel %vm914, %v911, %v913
        %v917 = vlaneseq
        %vm918 = vcmp.ge.s32.totalorder %v917, 0
        %vm919 = vcmp.lt.s32.totalorder %v917, 512
        %vm920 = vmand %vm918, %vm919
        %921 = vst.msk [vmem:[%s286] sm:$0xf] %vm920, %v915
        %s922 = sand.u32 %s186, 1
        %s923 = scalar_lea.sflag [#allocation3], %s922
        %s924 = sand.u32 %s186, 1
        %s925 = smul.addr %s924, 4
        %s926 = scalar_lea.vmem [#allocation2], %s925
        // Predicated region
        $region49: #{tpu_custom_call.1} parent=47 // pred_check
          %p927 = pneg %p196
        $region50: #{tpu_custom_call.1} parent=47 // pred_check_branch
          %929 = sbr.rel (%p927) target = $region52
        $region51: #{tpu_custom_call.1} parent=47 // pred_region
          %s930 = smul.u32 4, %s21
          %932 = vsyncadd %s923, 0
          %s933 = scalar_lea.hbm %s7, %s930
          %s935 = sshll.u32 %s926, 4
          %s936 = int_to_ptr.vmem [resolvable:$true] %s935
          %s937 = sshll.u32 %s933, 4
          %s938 = int_to_ptr.hbm [resolvable:$true] %s937
          %940 = dma.vmem_to_hbm [thread:$0]  %s936, 64, %s938, %s923
        $region52: #{tpu_custom_call.1} parent=47 // pred_fallthru
          _
      $region48: #{tpu_custom_call.1} parent=5 // pred_fallthru
        _
      %p941 = scmp.le.s32.totalorder 2, %s16
      // Predicated region
      $region53: #{tpu_custom_call.1} parent=5 // pred_check
        %p942 = pneg %p941
      $region54: #{tpu_custom_call.1} parent=5 // pred_check_branch
        %944 = sbr.rel (%p942) target = $region56
      $region55: #{tpu_custom_call.1} parent=5 // pred_region
        %s945 = ssub.s32 %s16, 2
        // Predicated region
        $region57: #{tpu_custom_call.1} parent=55 // pred_check
          %p946 = pneg %p202
        $region58: #{tpu_custom_call.1} parent=55 // pred_check_branch
          %948 = sbr.rel (%p946) target = $region60
        $region59: #{tpu_custom_call.1} parent=55 // pred_region
          %s949 = sand.u32 %s187, 1
          %s950 = scalar_lea.sflag [#allocation3], %s949
          %s951 = sand.u32 %s187, 1
          %s952 = smul.addr %s951, 4
          %s953 = scalar_lea.vmem [#allocation2], %s952
          %955 = dma.done %s950, 64
        $region60: #{tpu_custom_call.1} parent=55 // pred_fallthru
          _
      $region56: #{tpu_custom_call.1} parent=5 // pred_fallthru
        _
    $region6: #{tpu_custom_call.1} parent=1 // loop_footer
      %s20 = sadd.s32 1, %s16
    $region7: #{tpu_custom_call.1} parent=1 // loop_footer_branch
      %15 = sbr.rel target = $region3
    $region8: #{tpu_custom_call.1} parent=1 // loop_exit
      _
    %956 = vsyncpa [#allocation3], 1
    %s957 = scalar_lea.sflag [#allocation3], 1
    %958 = vsyncpa %s957, 1

</llo_original>
